<compile_context>
chip_gen: v5e
topology: v5e:2x2
jax: 0.10.0
libtpu: 0.0.40
codegen_flags: <defaults>
</compile_context>

<pallas_src>
import functools

import jax
import jax.numpy as jnp
import numpy as np
from jax.experimental import pallas as pl
from jax.experimental.pallas import tpu as pltpu


def _res_edge_kernel(x_ref, e_ref, w1t_ref, b1_ref, w2t_ref, b2_ref, out_ref):
    # x_ref:   [f_in,    tile_e]  bf16  -- pre-concatenated [src|dst|e|u[batch]]^T
    # e_ref:   [f_e,     tile_e]  f32   -- residual stream (exact f32)
    # w1t_ref: [hidden,  f_in]    f32   (resident)
    # b1_ref:  [hidden,  1]       f32   (resident)
    # w2t_ref: [f_e_out, hidden]  f32   (resident)
    # b2_ref:  [f_e_out, 1]       f32   (resident)
    # out_ref: [f_e_out, tile_e]  f32   -- lane-dense output block
    x = x_ref[...].astype(jnp.float32)                       # upcast once (VPU)
    h = jnp.dot(w1t_ref[...], x, preferred_element_type=jnp.float32)
    h = jnp.maximum(h + b1_ref[...], 0.0)                    # [hidden, tile_e]
    out = jnp.dot(w2t_ref[...], h, preferred_element_type=jnp.float32)
    out_ref[...] = out + b2_ref[...] + e_ref[...]            # residual in f32


@functools.partial(jax.jit, static_argnames=("tile_e", "stream_dtype"))
def res_edge_forward(src, dst, e, u, batch, params, *, tile_e=512,
                     stream_dtype=jnp.bfloat16):
    """src/dst: [E, f_x], e: [E, f_e], u: [B, f_u], batch: [E] int32."""
    E, f_x = src.shape
    f_e = e.shape[1]
    f_u = u.shape[1]
    hidden = params["w1"].shape[1]
    f_e_out = params["w2"].shape[1]
    f_in = 2 * f_x + f_e + f_u
    assert params["w1"].shape[0] == f_in
    assert f_e_out == f_e, "residual requires f_e_out == f_e (PyTorch default)"
    assert tile_e % 128 == 0, "tile_e must be a multiple of 128 (lane-dense blocks)"

    # ---- wrapper-side layout plumbing (cheap XLA ops, fused under jit) ----
    u_e = jnp.take(u, batch, axis=0)            # [E, f_u]; OOB ids clamp (XLA)
    x = jnp.concatenate([src, dst, e, u_e], axis=1)          # [E, f_in]

    e_pad = tile_e * pl.cdiv(E, tile_e)
    pad = e_pad - E
    xt = jnp.pad(x, ((0, pad), (0, 0))).T.astype(stream_dtype)   # [f_in, E_pad]
    et = jnp.pad(e, ((0, pad), (0, 0))).T.astype(jnp.float32)    # [f_e,  E_pad]

    w1t = params["w1"].T.astype(jnp.float32)                 # [hidden, f_in]
    b1c = params["b1"].reshape(hidden, 1).astype(jnp.float32)
    w2t = params["w2"].T.astype(jnp.float32)                 # [f_e_out, hidden]
    b2c = params["b2"].reshape(f_e_out, 1).astype(jnp.float32)

    def edge_spec(rows):
        return pl.BlockSpec((rows, tile_e), lambda i: (0, i))

    def resident_spec(arr):
        return pl.BlockSpec(arr.shape, lambda i: (0, 0))

    out_t = pl.pallas_call(
        _res_edge_kernel,
        out_shape=jax.ShapeDtypeStruct((f_e_out, e_pad), jnp.float32),
        grid=(e_pad // tile_e,),
        in_specs=[
            edge_spec(f_in),          # X^T (bf16 feature slab)
            edge_spec(f_e),           # e^T (f32 residual)
            resident_spec(w1t),
            resident_spec(b1c),
            resident_spec(w2t),
            resident_spec(b2c),
        ],
        out_specs=pl.BlockSpec((f_e_out, tile_e), lambda i: (0, i)),
        compiler_params=pltpu.CompilerParams(
            dimension_semantics=("parallel",),
        ),
    )(xt, et, w1t, b1c, w2t, b2c)

    return out_t[:, :E].T                                    # [E, f_e_out]


if __name__ == "__main__":
    # Small ResEdgeModel-consistent shapes; E is intentionally NOT a multiple
    # of tile_e to exercise the padding path.
    E = 1000        # total edges across all graphs
    B = 2           # number of graphs
    F_X = 8         # node feature size (src/dest)
    F_E = 16        # edge feature size (== f_e_out, residual)
    F_U = 4         # global feature size
    HIDDEN = 32     # model_fn hidden layer size
    F_IN = F_E + 2 * F_X + F_U

    key = jax.random.PRNGKey(0)
    keys = jax.random.split(key, 6)

    src = jax.random.normal(keys[0], (E, F_X), dtype=jnp.float32)
    dst = jax.random.normal(keys[1], (E, F_X), dtype=jnp.float32)
    e = jax.random.normal(keys[2], (E, F_E), dtype=jnp.float32)
    u = jax.random.normal(keys[3], (B, F_U), dtype=jnp.float32)
    # sorted batch ids, as produced by PyG batching
    batch = jnp.concatenate([jnp.zeros(E // 2, jnp.int32),
                             jnp.ones(E - E // 2, jnp.int32)])

    def init_linear(k, fin, fout):
        kw, kb = jax.random.split(k)
        bound = 1.0 / np.sqrt(fin)
        w = jax.random.uniform(kw, (fin, fout), jnp.float32, -bound, bound)
        b = jax.random.uniform(kb, (fout,), jnp.float32, -bound, bound)
        return w, b

    w1, b1 = init_linear(keys[4], F_IN, HIDDEN)   # phi_e layer 1 (on concat)
    w2, b2 = init_linear(keys[5], HIDDEN, F_E)    # phi_e layer 2
    params = dict(w1=w1, b1=b1, w2=w2, b2=b2)

    out = jax.block_until_ready(
        res_edge_forward(src, dst, e, u, batch, params, tile_e=512))
    assert out.shape == (E, F_E)

    # ---- references (numpy, exact math) ----------------------------------
    cat = np.concatenate([np.asarray(src), np.asarray(dst), np.asarray(e),
                          np.asarray(u)[np.asarray(batch)]], axis=1)

    def ref_mlp(c):
        h = np.maximum(c @ np.asarray(w1) + np.asarray(b1), 0.0)
        return h @ np.asarray(w2) + np.asarray(b2) + np.asarray(e)

    # Precision-matched reference: features quantized to bf16 exactly as
    # streamed by the kernel (residual e stays f32) -> tight tolerance.
    cat_bf16 = np.asarray(
        jnp.asarray(cat).astype(jnp.bfloat16).astype(jnp.float32))
    np.testing.assert_allclose(np.asarray(out), ref_mlp(cat_bf16),
                               rtol=1e-4, atol=1e-4)

    # Full f32 module reference: loose check (only bf16 feature-stream
    # quantization separates them).
    np.testing.assert_allclose(np.asarray(out), ref_mlp(cat),
                               rtol=2e-2, atol=5e-2)

    print("KERNEL_OK")
</pallas_src>

<mosaic_0001>
module attributes {stable_mosaic.version = 11 : i64} {
  func.func @_res_edge_kernel(%arg0: i32, %arg1: memref<36x512xbf16, #tpu.memory_space<vmem>>, %arg2: memref<16x512xf32, #tpu.memory_space<vmem>>, %arg3: memref<32x36xf32, #tpu.memory_space<vmem>>, %arg4: memref<32x1xf32, #tpu.memory_space<vmem>>, %arg5: memref<16x32xf32, #tpu.memory_space<vmem>>, %arg6: memref<16x1xf32, #tpu.memory_space<vmem>>, %arg7: memref<16x512xf32, #tpu.memory_space<vmem>>) attributes {dimension_semantics = [#tpu.dimension_semantics<parallel>], iteration_bounds = array<i64: 2>, scalar_prefetch = 0 : i64, scratch_operands = 0 : i64, tpu.core_type = #tpu.core_type<tc>, window_params = [{transform_indices = @transform_0, window_bounds = array<i64: 36, 512>}, {transform_indices = @transform_1, window_bounds = array<i64: 16, 512>}, {pipeline_mode = #tpu.pipeline_mode<synchronous>, transform_indices = @transform_2, window_bounds = array<i64: 32, 36>}, {pipeline_mode = #tpu.pipeline_mode<synchronous>, transform_indices = @transform_3, window_bounds = array<i64: 32, 1>}, {pipeline_mode = #tpu.pipeline_mode<synchronous>, transform_indices = @transform_4, window_bounds = array<i64: 16, 32>}, {pipeline_mode = #tpu.pipeline_mode<synchronous>, transform_indices = @transform_5, window_bounds = array<i64: 16, 1>}, {transform_indices = @transform_6, window_bounds = array<i64: 16, 512>}]} {
    %c0 = arith.constant 0 : index
    %c0_0 = arith.constant 0 : index
    %0 = vector.load %arg1[%c0, %c0_0] : memref<36x512xbf16, #tpu.memory_space<vmem>>, vector<36x512xbf16>
    %1 = arith.extf %0 : vector<36x512xbf16> to vector<36x512xf32>
    %c0_1 = arith.constant 0 : index
    %c0_2 = arith.constant 0 : index
    %2 = vector.load %arg3[%c0_1, %c0_2] : memref<32x36xf32, #tpu.memory_space<vmem>>, vector<32x36xf32>
    %cst = arith.constant dense<0.000000e+00> : vector<32x512xf32>
    %3 = tpu.matmul %2, %1, %cst {dimension_numbers = #tpu.dot_dimension_numbers<[1], [0], [0], [1], [0, 0, 1, 1], [], []>} : vector<32x36xf32>, vector<36x512xf32>, vector<32x512xf32> -> vector<32x512xf32>
    %c0_3 = arith.constant 0 : index
    %c0_4 = arith.constant 0 : index
    %4 = vector.load %arg4[%c0_3, %c0_4] : memref<32x1xf32, #tpu.memory_space<vmem>>, vector<32x1xf32>
    %5 = vector.broadcast %4 : vector<32x1xf32> to vector<32x512xf32>
    %6 = arith.addf %3, %5 : vector<32x512xf32>
    %cst_5 = arith.constant 0.000000e+00 : f32
    %7 = vector.broadcast %cst_5 : f32 to vector<32x512xf32>
    %8 = arith.maximumf %6, %7 : vector<32x512xf32>
    %c0_6 = arith.constant 0 : index
    %c0_7 = arith.constant 0 : index
    %9 = vector.load %arg5[%c0_6, %c0_7] : memref<16x32xf32, #tpu.memory_space<vmem>>, vector<16x32xf32>
    %cst_8 = arith.constant dense<0.000000e+00> : vector<16x512xf32>
    %10 = tpu.matmul %9, %8, %cst_8 {dimension_numbers = #tpu.dot_dimension_numbers<[1], [0], [0], [1], [0, 0, 1, 1], [], []>} : vector<16x32xf32>, vector<32x512xf32>, vector<16x512xf32> -> vector<16x512xf32>
    %c0_9 = arith.constant 0 : index
    %c0_10 = arith.constant 0 : index
    %11 = vector.load %arg6[%c0_9, %c0_10] : memref<16x1xf32, #tpu.memory_space<vmem>>, vector<16x1xf32>
    %12 = vector.broadcast %11 : vector<16x1xf32> to vector<16x512xf32>
    %13 = arith.addf %10, %12 : vector<16x512xf32>
    %c0_11 = arith.constant 0 : index
    %c0_12 = arith.constant 0 : index
    %14 = vector.load %arg2[%c0_11, %c0_12] : memref<16x512xf32, #tpu.memory_space<vmem>>, vector<16x512xf32>
    %15 = arith.addf %13, %14 : vector<16x512xf32>
    %c0_13 = arith.constant 0 : index
    %c0_14 = arith.constant 0 : index
    %16 = vector.load %arg7[%c0_13, %c0_14] : memref<16x512xf32, #tpu.memory_space<vmem>>, vector<16x512xf32>
    tpu.vector_store %arg7[%c0_13, %c0_14], %15 {strides = array<i32>} : memref<16x512xf32, #tpu.memory_space<vmem>>, vector<16x512xf32>,
    return
  }
  func.func @transform_0(%arg0: i32) -> (i32, i32) {
    %c0_i32 = arith.constant 0 : i32
    %c0_i32_0 = arith.constant 0 : i32
    return %c0_i32, %arg0 : i32, i32
  }
  func.func @transform_1(%arg0: i32) -> (i32, i32) {
    %c0_i32 = arith.constant 0 : i32
    %c0_i32_0 = arith.constant 0 : i32
    return %c0_i32, %arg0 : i32, i32
  }
  func.func @transform_2(%arg0: i32) -> (i32, i32) {
    %c0_i32 = arith.constant 0 : i32
    %c0_i32_0 = arith.constant 0 : i32
    %c0_i32_1 = arith.constant 0 : i32
    return %c0_i32, %c0_i32_0 : i32, i32
  }
  func.func @transform_3(%arg0: i32) -> (i32, i32) {
    %c0_i32 = arith.constant 0 : i32
    %c0_i32_0 = arith.constant 0 : i32
    %c0_i32_1 = arith.constant 0 : i32
    return %c0_i32, %c0_i32_0 : i32, i32
  }
  func.func @transform_4(%arg0: i32) -> (i32, i32) {
    %c0_i32 = arith.constant 0 : i32
    %c0_i32_0 = arith.constant 0 : i32
    %c0_i32_1 = arith.constant 0 : i32
    return %c0_i32, %c0_i32_0 : i32, i32
  }
  func.func @transform_5(%arg0: i32) -> (i32, i32) {
    %c0_i32 = arith.constant 0 : i32
    %c0_i32_0 = arith.constant 0 : i32
    %c0_i32_1 = arith.constant 0 : i32
    return %c0_i32, %c0_i32_0 : i32, i32
  }
  func.func @transform_6(%arg0: i32) -> (i32, i32) {
    %c0_i32 = arith.constant 0 : i32
    %c0_i32_0 = arith.constant 0 : i32
    return %c0_i32, %arg0 : i32, i32
  }
}

</mosaic_0001>

<llo_original>
// kernel: res_edge_forward.1
$region0: #{res_edge_forward.1}
  #allocation0 [shape = 'u32[]', space=smem, size = 0x4, offset = 0x4, fixed_abs, tag = 'smem constant byte address 0x4 - core index']
  #allocation1 [shape = 'u32[72,128]{1,0:T(1,128)}', space=vmem, size = 0x9000, scoped, tag = 'internal scratch']
  %s0 = inlined_call_operand.vmem [shape: bf16[36,1024], index: 0, kind: input, shape index: {}]
  %s1 = inlined_call_operand.vmem [shape: f32[16,1024], index: 1, kind: input, shape index: {}]
  %s2 = inlined_call_operand.vmem [shape: f32[32,36], index: 2, kind: input, shape index: {}]
  %s3 = inlined_call_operand.vmem [shape: f32[32,1], index: 3, kind: input, shape index: {}]
  %s4 = inlined_call_operand.vmem [shape: f32[16,32], index: 4, kind: input, shape index: {}]
  %s5 = inlined_call_operand.vmem [shape: f32[16,1], index: 5, kind: input, shape index: {}]
  %s6 = inlined_call_operand.vmem [shape: f32[16,1024], index: 6, kind: output, shape index: {}]
  %s7 = sld [smem:[#allocation0]]
  $region122: #{res_edge_forward.1} parent=0
    _
  %s9 = ssub.s32 1, %s7
  %s10 = scalar_select 0, %s9, %s7
  $region1: #{res_edge_forward.1} parent=0
    #allocation2 [shape = 'u8[81920]{0}', space=vmem, size = 0x14000, scoped, tag = 'input window, operand 0']
    #allocation3 [shape = 'u8[65536]{0}', space=vmem, size = 0x10000, scoped, tag = 'input window, operand 1']
    #allocation4 [shape = 'u8[65536]{0}', space=vmem, size = 0x10000, scoped, tag = 'output window, operand 0']
    loop: start=0, step=1, limit=4
    $region2: #{res_edge_forward.1} parent=1 // loop_pre_header
      _
    $region3: #{res_edge_forward.1} parent=1 // loop_header
      %s12 = sphi 0, %s16
      %p13 = scmp.ge.s32.totalorder %s12, 4
      %s22 = sphi 0, %s24
      %s25 = sphi 0, %s22
      %s26 = sphi 0, %s25
      %s42 = sphi 0, %s26
      %s48 = sphi 0, %s50
      %s51 = sphi 0, %s48
      %s52 = sphi 0, %s51
      %s68 = sphi 0, %s52
      %s72 = sphi 0, %s72
      %s74 = sphi 0, %s72
      %s75 = sphi 0, %s74
      %s89 = sphi 0, %s75
      %s93 = sphi 0, %s93
      %s95 = sphi 0, %s93
      %s96 = sphi 0, %s95
      %s110 = sphi 0, %s96
      %s114 = sphi 0, %s114
      %s116 = sphi 0, %s114
      %s117 = sphi 0, %s116
      %s131 = sphi 0, %s117
      %s135 = sphi 0, %s135
      %s137 = sphi 0, %s135
      %s138 = sphi 0, %s137
      %s152 = sphi 0, %s138
      %s158 = sphi 0, %s160
      %s161 = sphi 0, %s158
      %s162 = sphi 0, %s161
      %s178 = sphi 0, %s162
    $region4: #{res_edge_forward.1} parent=1 // loop_header_branch
      %15 = sbr.rel (%p13) target = $region8
    $region5: #{res_edge_forward.1} parent=1 // loop_body
      %s17 = ssub.s32 %s12, 1
      %s18 = ssub.s32 %s12, 2
      %s19 = sadd.s32 %s12, 1
      %s20 = ssub.s32 %s12, %s19
      %p21 = scmp.eq.s32.totalorder %s20, 0
      %s23 = sadd.s32 %s22, 1
      %s24 = scalar_select %p21, %s22, %s23
      %p27 = pneg %p21
      %p28 = scmp.eq.s32.totalorder %s12, 1
      %p29 = por %p27, %p28
      %p30 = scmp.ne.s32.totalorder %s22, %s25
      %p31 = scmp.eq.s32.totalorder %s12, 0
      %p32 = por %p30, %p31
      %p33 = scmp.ne.s32.totalorder %s22, %s25
      %p34 = scmp.eq.s32.totalorder %s17, 1
      %p35 = por %p33, %p34
      %p36 = scmp.ne.s32.totalorder %s25, %s26
      %p37 = scmp.eq.s32.totalorder %s17, 0
      %p38 = por %p36, %p37
      %p39 = scmp.ne.s32.totalorder %s25, %s26
      %p40 = scmp.eq.s32.totalorder %s18, 1
      %p41 = por %p39, %p40
      %p43 = scmp.ne.s32.totalorder %s26, %s42
      %p44 = scmp.eq.s32.totalorder %s18, 0
      %p45 = por %p43, %p44
      %s46 = ssub.s32 %s12, %s19
      %p47 = scmp.eq.s32.totalorder %s46, 0
      %s49 = sadd.s32 %s48, 1
      %s50 = scalar_select %p47, %s48, %s49
      %p53 = pneg %p47
      %p54 = scmp.eq.s32.totalorder %s12, 1
      %p55 = por %p53, %p54
      %p56 = scmp.ne.s32.totalorder %s48, %s51
      %p57 = scmp.eq.s32.totalorder %s12, 0
      %p58 = por %p56, %p57
      %p59 = scmp.ne.s32.totalorder %s48, %s51
      %p60 = scmp.eq.s32.totalorder %s17, 1
      %p61 = por %p59, %p60
      %p62 = scmp.ne.s32.totalorder %s51, %s52
      %p63 = scmp.eq.s32.totalorder %s17, 0
      %p64 = por %p62, %p63
      %p65 = scmp.ne.s32.totalorder %s51, %s52
      %p66 = scmp.eq.s32.totalorder %s18, 1
      %p67 = por %p65, %p66
      %p69 = scmp.ne.s32.totalorder %s52, %s68
      %p70 = scmp.eq.s32.totalorder %s18, 0
      %p71 = por %p69, %p70
      %s73 = sadd.s32 %s72, 1
      %p76 = scmp.eq.s32.totalorder %s12, 1
      %p77 = scmp.ne.s32.totalorder %s72, %s74
      %p78 = scmp.eq.s32.totalorder %s12, 0
      %p79 = por %p77, %p78
      %p80 = scmp.ne.s32.totalorder %s72, %s74
      %p81 = scmp.eq.s32.totalorder %s17, 1
      %p82 = por %p80, %p81
      %p83 = scmp.ne.s32.totalorder %s74, %s75
      %p84 = scmp.eq.s32.totalorder %s17, 0
      %p85 = por %p83, %p84
      %p86 = scmp.ne.s32.totalorder %s74, %s75
      %p87 = scmp.eq.s32.totalorder %s18, 1
      %p88 = por %p86, %p87
      %p90 = scmp.ne.s32.totalorder %s75, %s89
      %p91 = scmp.eq.s32.totalorder %s18, 0
      %p92 = por %p90, %p91
      %s94 = sadd.s32 %s93, 1
      %p97 = scmp.eq.s32.totalorder %s12, 1
      %p98 = scmp.ne.s32.totalorder %s93, %s95
      %p99 = scmp.eq.s32.totalorder %s12, 0
      %p100 = por %p98, %p99
      %p101 = scmp.ne.s32.totalorder %s93, %s95
      %p102 = scmp.eq.s32.totalorder %s17, 1
      %p103 = por %p101, %p102
      %p104 = scmp.ne.s32.totalorder %s95, %s96
      %p105 = scmp.eq.s32.totalorder %s17, 0
      %p106 = por %p104, %p105
      %p107 = scmp.ne.s32.totalorder %s95, %s96
      %p108 = scmp.eq.s32.totalorder %s18, 1
      %p109 = por %p107, %p108
      %p111 = scmp.ne.s32.totalorder %s96, %s110
      %p112 = scmp.eq.s32.totalorder %s18, 0
      %p113 = por %p111, %p112
      %s115 = sadd.s32 %s114, 1
      %p118 = scmp.eq.s32.totalorder %s12, 1
      %p119 = scmp.ne.s32.totalorder %s114, %s116
      %p120 = scmp.eq.s32.totalorder %s12, 0
      %p121 = por %p119, %p120
      %p122 = scmp.ne.s32.totalorder %s114, %s116
      %p123 = scmp.eq.s32.totalorder %s17, 1
      %p124 = por %p122, %p123
      %p125 = scmp.ne.s32.totalorder %s116, %s117
      %p126 = scmp.eq.s32.totalorder %s17, 0
      %p127 = por %p125, %p126
      %p128 = scmp.ne.s32.totalorder %s116, %s117
      %p129 = scmp.eq.s32.totalorder %s18, 1
      %p130 = por %p128, %p129
      %p132 = scmp.ne.s32.totalorder %s117, %s131
      %p133 = scmp.eq.s32.totalorder %s18, 0
      %p134 = por %p132, %p133
      %s136 = sadd.s32 %s135, 1
      %p139 = scmp.eq.s32.totalorder %s12, 1
      %p140 = scmp.ne.s32.totalorder %s135, %s137
      %p141 = scmp.eq.s32.totalorder %s12, 0
      %p142 = por %p140, %p141
      %p143 = scmp.ne.s32.totalorder %s135, %s137
      %p144 = scmp.eq.s32.totalorder %s17, 1
      %p145 = por %p143, %p144
      %p146 = scmp.ne.s32.totalorder %s137, %s138
      %p147 = scmp.eq.s32.totalorder %s17, 0
      %p148 = por %p146, %p147
      %p149 = scmp.ne.s32.totalorder %s137, %s138
      %p150 = scmp.eq.s32.totalorder %s18, 1
      %p151 = por %p149, %p150
      %p153 = scmp.ne.s32.totalorder %s138, %s152
      %p154 = scmp.eq.s32.totalorder %s18, 0
      %p155 = por %p153, %p154
      %s156 = ssub.s32 %s12, %s19
      %p157 = scmp.eq.s32.totalorder %s156, 0
      %s159 = sadd.s32 %s158, 1
      %s160 = scalar_select %p157, %s158, %s159
      %p163 = pneg %p157
      %p164 = scmp.eq.s32.totalorder %s12, 1
      %p165 = por %p163, %p164
      %p166 = scmp.ne.s32.totalorder %s158, %s161
      %p167 = scmp.eq.s32.totalorder %s12, 0
      %p168 = por %p166, %p167
      %p169 = scmp.ne.s32.totalorder %s158, %s161
      %p170 = scmp.eq.s32.totalorder %s17, 1
      %p171 = por %p169, %p170
      %p172 = scmp.ne.s32.totalorder %s161, %s162
      %p173 = scmp.eq.s32.totalorder %s17, 0
      %p174 = por %p172, %p173
      %p175 = scmp.ne.s32.totalorder %s161, %s162
      %p176 = scmp.eq.s32.totalorder %s18, 1
      %p177 = por %p175, %p176
      %p179 = scmp.ne.s32.totalorder %s162, %s178
      %p180 = scmp.eq.s32.totalorder %s18, 0
      %p181 = por %p179, %p180
      %p182 = scmp.le.s32.totalorder 1, %s12
      %p183 = scmp.lt.s32.totalorder %s12, 3
      %p184 = pnand %p182, %p183
      %p185 = pneg %p184
      // Predicated region
      $region9: #{res_edge_forward.1} parent=5 // pred_check
        _
      $region10: #{res_edge_forward.1} parent=5 // pred_check_branch
        %187 = sbr.rel (%p184) target = $region12
      $region11: #{res_edge_forward.1} parent=5 // pred_region
        %s188 = ssub.s32 %s12, 1
        // Predicated region
        $region13: #{res_edge_forward.1} parent=11 // pred_check
          %p189 = pneg %p85
        $region14: #{res_edge_forward.1} parent=11 // pred_check_branch
          %191 = sbr.rel (%p189) target = $region16
        $region15: #{res_edge_forward.1} parent=11 // pred_region
          _
        $region16: #{res_edge_forward.1} parent=11 // pred_fallthru
          _
        // Predicated region
        $region17: #{res_edge_forward.1} parent=11 // pred_check
          %p192 = pneg %p106
        $region18: #{res_edge_forward.1} parent=11 // pred_check_branch
          %194 = sbr.rel (%p192) target = $region20
        $region19: #{res_edge_forward.1} parent=11 // pred_region
          _
        $region20: #{res_edge_forward.1} parent=11 // pred_fallthru
          _
        // Predicated region
        $region21: #{res_edge_forward.1} parent=11 // pred_check
          %p195 = pneg %p127
        $region22: #{res_edge_forward.1} parent=11 // pred_check_branch
          %197 = sbr.rel (%p195) target = $region24
        $region23: #{res_edge_forward.1} parent=11 // pred_region
          _
        $region24: #{res_edge_forward.1} parent=11 // pred_fallthru
          _
        // Predicated region
        $region25: #{res_edge_forward.1} parent=11 // pred_check
          %p198 = pneg %p148
        $region26: #{res_edge_forward.1} parent=11 // pred_check_branch
          %200 = sbr.rel (%p198) target = $region28
        $region27: #{res_edge_forward.1} parent=11 // pred_region
          _
        $region28: #{res_edge_forward.1} parent=11 // pred_fallthru
          _
      $region12: #{res_edge_forward.1} parent=5 // pred_fallthru
        _
      %p201 = scmp.lt.s32.totalorder %s12, 2
      // Predicated region
      $region29: #{res_edge_forward.1} parent=5 // pred_check
        %p202 = pneg %p201
      $region30: #{res_edge_forward.1} parent=5 // pred_check_branch
        %204 = sbr.rel (%p202) target = $region32
      $region31: #{res_edge_forward.1} parent=5 // pred_region
        // Predicated region
        $region33: #{res_edge_forward.1} parent=31 // pred_check
          %p205 = pneg %p32
        $region34: #{res_edge_forward.1} parent=31 // pred_check_branch
          %207 = sbr.rel (%p205) target = $region36
        $region35: #{res_edge_forward.1} parent=31 // pred_region
          %s208 = sand.u32 %s22, 1
          %s209 = sand.u32 %s22, 1
          %s210 = smul.addr %s209, 80
          %s211 = scalar_lea.vmem [#allocation2], %s210
          %s212 = smul.u32 4, %s12
          %s213 = smul.addr %s212, 4
          %s214 = scalar_lea.vmem %s0, %s213
          // Predicated region
          $region37: #{res_edge_forward.1} parent=35 // pred_check
            _
          $region38: #{res_edge_forward.1} parent=35 // pred_check_branch
            %216 = sbr.rel (0) target = $region40
          $region39: #{res_edge_forward.1} parent=35 // pred_region
            // Predicated region
            $region41: #{res_edge_forward.1} parent=39 // pred_check
              _
            $region42: #{res_edge_forward.1} parent=39 // pred_check_branch
              %218 = sbr.rel (0) target = $region44
            $region43: #{res_edge_forward.1} parent=39 // pred_region
              loop: start=0, step=1, limit=1
              $region45: #{res_edge_forward.1} parent=43 // loop_pre_header
                _
              $region46: #{res_edge_forward.1} parent=43 // loop_header
                %s220 = sphi 0, %s224
                %p221 = scmp.ge.s32.totalorder %s220, 1
                %s225 = sphi %s214, %s214
                %s226 = sphi %s211, %s211
              $region47: #{res_edge_forward.1} parent=43 // loop_header_branch
                %223 = sbr.rel (%p221) target = $region51
              $region48: #{res_edge_forward.1} parent=43 // loop_body
                %v227 = vld [vmem:[%s225] sm:$0xff]
                %228 = vst [vmem:[%s226] sm:$0xff] %v227
                %v229 = vld [vmem:[%s225 + $0x8] sm:$0xff]
                %230 = vst [vmem:[%s226 + $0x8] sm:$0xff] %v229
                %v231 = vld [vmem:[%s225 + $0x20] sm:$0xff]
                %232 = vst [vmem:[%s226 + $0x10] sm:$0xff] %v231
                %v233 = vld [vmem:[%s225 + $0x28] sm:$0xff]
                %234 = vst [vmem:[%s226 + $0x18] sm:$0xff] %v233
                %v235 = vld [vmem:[%s225 + $0x40] sm:$0xff]
                %236 = vst [vmem:[%s226 + $0x20] sm:$0xff] %v235
                %v237 = vld [vmem:[%s225 + $0x48] sm:$0xff]
                %238 = vst [vmem:[%s226 + $0x28] sm:$0xff] %v237
                %v239 = vld [vmem:[%s225 + $0x60] sm:$0xff]
                %240 = vst [vmem:[%s226 + $0x30] sm:$0xff] %v239
                %v241 = vld [vmem:[%s225 + $0x68] sm:$0xff]
                %242 = vst [vmem:[%s226 + $0x38] sm:$0xff] %v241
                %v243 = vld [vmem:[%s225 + $0x80] sm:$0xff]
                %244 = vst [vmem:[%s226 + $0x40] sm:$0xff] %v243
                %v245 = vld [vmem:[%s225 + $0x88] sm:$0xff]
                %246 = vst [vmem:[%s226 + $0x48] sm:$0xff] %v245
              $region49: #{res_edge_forward.1} parent=43 // loop_footer
                %s224 = sadd.s32 1, %s220
              $region50: #{res_edge_forward.1} parent=43 // loop_footer_branch
                %219 = sbr.rel target = $region46
              $region51: #{res_edge_forward.1} parent=43 // loop_exit
                _
            $region44: #{res_edge_forward.1} parent=39 // pred_fallthru
              _
            // Predicated region
            $region52: #{res_edge_forward.1} parent=39 // pred_check
              _
            $region53: #{res_edge_forward.1} parent=39 // pred_check_branch
              %248 = sbr.rel target = $region55
            $region54: #{res_edge_forward.1} parent=39 // pred_region
              _
            $region55: #{res_edge_forward.1} parent=39 // pred_fallthru
              _
          $region40: #{res_edge_forward.1} parent=35 // pred_fallthru
            _
          %249 = vnop
        $region36: #{res_edge_forward.1} parent=31 // pred_fallthru
          _
        // Predicated region
        $region56: #{res_edge_forward.1} parent=31 // pred_check
          %p250 = pneg %p58
        $region57: #{res_edge_forward.1} parent=31 // pred_check_branch
          %252 = sbr.rel (%p250) target = $region59
        $region58: #{res_edge_forward.1} parent=31 // pred_region
          %s253 = sand.u32 %s48, 1
          %s254 = sand.u32 %s48, 1
          %s255 = smul.addr %s254, 64
          %s256 = scalar_lea.vmem [#allocation3], %s255
          %s257 = smul.u32 4, %s12
          %s258 = smul.addr %s257, 8
          %s259 = scalar_lea.vmem %s1, %s258
          // Predicated region
          $region60: #{res_edge_forward.1} parent=58 // pred_check
            _
          $region61: #{res_edge_forward.1} parent=58 // pred_check_branch
            %261 = sbr.rel (0) target = $region63
          $region62: #{res_edge_forward.1} parent=58 // pred_region
            // Predicated region
            $region64: #{res_edge_forward.1} parent=62 // pred_check
              _
            $region65: #{res_edge_forward.1} parent=62 // pred_check_branch
              %263 = sbr.rel (0) target = $region67
            $region66: #{res_edge_forward.1} parent=62 // pred_region
              loop: start=0, step=1, limit=1
              $region68: #{res_edge_forward.1} parent=66 // loop_pre_header
                _
              $region69: #{res_edge_forward.1} parent=66 // loop_header
                %s265 = sphi 0, %s269
                %p266 = scmp.ge.s32.totalorder %s265, 1
                %s270 = sphi %s259, %s259
                %s271 = sphi %s256, %s256
              $region70: #{res_edge_forward.1} parent=66 // loop_header_branch
                %268 = sbr.rel (%p266) target = $region74
              $region71: #{res_edge_forward.1} parent=66 // loop_body
                %v272 = vld [vmem:[%s270] sm:$0xff]
                %273 = vst [vmem:[%s271] sm:$0xff] %v272
                %v274 = vld [vmem:[%s270 + $0x8] sm:$0xff]
                %275 = vst [vmem:[%s271 + $0x8] sm:$0xff] %v274
                %v276 = vld [vmem:[%s270 + $0x10] sm:$0xff]
                %277 = vst [vmem:[%s271 + $0x10] sm:$0xff] %v276
                %v278 = vld [vmem:[%s270 + $0x18] sm:$0xff]
                %279 = vst [vmem:[%s271 + $0x18] sm:$0xff] %v278
                %v280 = vld [vmem:[%s270 + $0x40] sm:$0xff]
                %281 = vst [vmem:[%s271 + $0x20] sm:$0xff] %v280
                %v282 = vld [vmem:[%s270 + $0x48] sm:$0xff]
                %283 = vst [vmem:[%s271 + $0x28] sm:$0xff] %v282
                %v284 = vld [vmem:[%s270 + $0x50] sm:$0xff]
                %285 = vst [vmem:[%s271 + $0x30] sm:$0xff] %v284
                %v286 = vld [vmem:[%s270 + $0x58] sm:$0xff]
                %287 = vst [vmem:[%s271 + $0x38] sm:$0xff] %v286
              $region72: #{res_edge_forward.1} parent=66 // loop_footer
                %s269 = sadd.s32 1, %s265
              $region73: #{res_edge_forward.1} parent=66 // loop_footer_branch
                %264 = sbr.rel target = $region69
              $region74: #{res_edge_forward.1} parent=66 // loop_exit
                _
            $region67: #{res_edge_forward.1} parent=62 // pred_fallthru
              _
            // Predicated region
            $region75: #{res_edge_forward.1} parent=62 // pred_check
              _
            $region76: #{res_edge_forward.1} parent=62 // pred_check_branch
              %289 = sbr.rel target = $region78
            $region77: #{res_edge_forward.1} parent=62 // pred_region
              _
            $region78: #{res_edge_forward.1} parent=62 // pred_fallthru
              _
          $region63: #{res_edge_forward.1} parent=58 // pred_fallthru
            _
          %290 = vnop
        $region59: #{res_edge_forward.1} parent=31 // pred_fallthru
          _
      $region32: #{res_edge_forward.1} parent=5 // pred_fallthru
        _
      %p291 = scmp.le.s32.totalorder 1, %s12
      %p292 = scmp.lt.s32.totalorder %s12, 3
      %p293 = pnand %p291, %p292
      %p294 = pneg %p293
      // Predicated region
      $region79: #{res_edge_forward.1} parent=5 // pred_check
        _
      $region80: #{res_edge_forward.1} parent=5 // pred_check_branch
        %296 = sbr.rel (%p293) target = $region82
      $region81: #{res_edge_forward.1} parent=5 // pred_region
        %s297 = ssub.s32 %s12, 1
        %s298 = sand.u32 %s25, 1
        %s299 = sand.u32 %s25, 1
        %s300 = smul.addr %s299, 80
        %s301 = scalar_lea.vmem [#allocation2], %s300
        // Predicated region
        $region83: #{res_edge_forward.1} parent=81 // pred_check
          %p302 = pneg %p38
        $region84: #{res_edge_forward.1} parent=81 // pred_check_branch
          %304 = sbr.rel (%p302) target = $region86
        $region85: #{res_edge_forward.1} parent=81 // pred_region
          _
        $region86: #{res_edge_forward.1} parent=81 // pred_fallthru
          _
        %s305 = sand.u32 %s51, 1
        %s306 = sand.u32 %s51, 1
        %s307 = smul.addr %s306, 64
        %s308 = scalar_lea.vmem [#allocation3], %s307
        // Predicated region
        $region87: #{res_edge_forward.1} parent=81 // pred_check
          %p309 = pneg %p64
        $region88: #{res_edge_forward.1} parent=81 // pred_check_branch
          %311 = sbr.rel (%p309) target = $region90
        $region89: #{res_edge_forward.1} parent=81 // pred_region
          _
        $region90: #{res_edge_forward.1} parent=81 // pred_fallthru
          _
        %s312 = sand.u32 %s25, 1
        %s313 = sand.u32 %s25, 1
        %s314 = smul.addr %s313, 80
        %s315 = scalar_lea.vmem [#allocation2], %s314
        %p316 = pneg %p38
        %p317 = pneg %p35
        %s318 = sand.u32 %s51, 1
        %s319 = sand.u32 %s51, 1
        %s320 = smul.addr %s319, 64
        %s321 = scalar_lea.vmem [#allocation3], %s320
        %p322 = pneg %p64
        %p323 = pneg %p61
        %p324 = pneg %p85
        %p325 = pneg %p82
        %p326 = pneg %p106
        %p327 = pneg %p103
        %p328 = pneg %p127
        %p329 = pneg %p124
        %p330 = pneg %p148
        %p331 = pneg %p145
        %p332 = pneg %p174
        %p333 = pneg %p171
        %s334 = sand.u32 %s161, 1
        %s335 = sand.u32 %s161, 1
        %s336 = smul.addr %s335, 64
        %s337 = scalar_lea.vmem [#allocation4], %s336
        %s338 = smul.u32 4, %s17
        %s339 = smul.u32 4, %s17
        %s340 = smul.u32 4, %s17
        %v341 = vld [vmem:[%s301] sm:$0xff]
        %v342 = vld [vmem:[%s301 + $0x8] sm:$0xff]
        %v343 = vld [vmem:[%s301 + $0x10] sm:$0xff]
        %v344 = vld [vmem:[%s301 + $0x18] sm:$0xff]
        %v345 = vld [vmem:[%s301 + $0x20] sm:$0xff]
        %v346 = vld [vmem:[%s301 + $0x28] sm:$0xff]
        %v347 = vld [vmem:[%s301 + $0x30] sm:$0xff]
        %v348 = vld [vmem:[%s301 + $0x38] sm:$0xff]
        %v349 = vld [vmem:[%s301 + $0x40] sm:$0x33]
        %v350 = vld [vmem:[%s301 + $0x48] sm:$0x33]
        %v351 = vunpack.c.l.bf16 %v341
        %v352 = vunpack.c.h.bf16 %v341
        %v353 = vunpack.c.l.bf16 %v342
        %v354 = vunpack.c.h.bf16 %v342
        %v355 = vunpack.c.l.bf16 %v343
        %v356 = vunpack.c.h.bf16 %v343
        %v357 = vunpack.c.l.bf16 %v344
        %v358 = vunpack.c.h.bf16 %v344
        %v359 = vunpack.c.l.bf16 %v345
        %v360 = vunpack.c.h.bf16 %v345
        %v361 = vunpack.c.l.bf16 %v346
        %v362 = vunpack.c.h.bf16 %v346
        %v363 = vunpack.c.l.bf16 %v347
        %v364 = vunpack.c.h.bf16 %v347
        %v365 = vunpack.c.l.bf16 %v348
        %v366 = vunpack.c.h.bf16 %v348
        %v367 = vunpack.c.l.bf16 %v349
        %v368 = vunpack.c.h.bf16 %v349
        %v369 = vunpack.c.l.bf16 %v350
        %v370 = vunpack.c.h.bf16 %v350
        %v371 = vld [vmem:[%s2] sm:$0xff]
        %v372 = vld [vmem:[%s2 + $0x8] sm:$0xff]
        %v373 = vld [vmem:[%s2 + $0x10] sm:$0xff]
        %v374 = vld [vmem:[%s2 + $0x18] sm:$0xff]
        %v375 = vld [vmem:[%s3] sm:$0xff]
        %v376 = vld [vmem:[%s3 + $0x8] sm:$0xff]
        %v377 = vld [vmem:[%s3 + $0x10] sm:$0xff]
        %v378 = vld [vmem:[%s3 + $0x18] sm:$0xff]
        %380 = vset.pattern.permute.xlu0 0
        %381 = vperm.xlu0 %380, %v375
        %v382 = vpop.permute.xlu0 %381
        %385 = vset.pattern.permute.xlu0 0
        %386 = vperm.xlu0 %385, %v376
        %v387 = vpop.permute.xlu0 %386
        %390 = vset.pattern.permute.xlu0 0
        %391 = vperm.xlu0 %390, %v377
        %v392 = vpop.permute.xlu0 %391
        %395 = vset.pattern.permute.xlu0 0
        %396 = vperm.xlu0 %395, %v378
        %v397 = vpop.permute.xlu0 %396
        %vm399 = vcmask 293888
        %v401 = vsel %vm399, %v371, 0
        %v404 = vsel %vm399, %v372, 0
        %v407 = vsel %vm399, %v373, 0
        %v410 = vsel %vm399, %v374, 0
        %vm412 = vcmask 1043456
        %v414 = vsel %vm412, %v367, 0
        %v417 = vsel %vm412, %v368, 0
        %v420 = vsel %vm412, %v369, 0
        %v423 = vsel %vm412, %v370, 0
        %425 = vmatpush.msra.mxu0 0.0
        %426 = vmatpush.msra.mxu0 0.0
        %427 = vmatpush.msra.mxu0 0.0
        %428 = vmatpush.msra.mxu0 0.0
        %429 = vmatpush.msra.mxu0 0.0
        %430 = vmatpush.msra.mxu0 0.0
        %431 = vmatpush.msra.mxu0 0.0
        %432 = vmatpush.msra.mxu0 0.0
        %433 = vmatpush.msra.mxu0 0.0
        %434 = vmatpush.msra.mxu0 0.0
        %435 = vmatpush.msra.mxu0 0.0
        %436 = vmatpush.msra.mxu0 %v414
        %437 = vmatpush.msra.mxu0 %v363
        %438 = vmatpush.msra.mxu0 %v359
        %439 = vmatpush.msra.mxu0 %v355
        %440 = vmatpush.msra.mxu0 %v351
        %441 = vmatmul.f32.gmra.mxu0 %v401
        %v442 = vpop.f32.mrf.mxu0
        %v443 = vadd.f32 %v382, %v442
        %444 = vmatmul.f32.gmra.mxu0 %v404
        %v445 = vpop.f32.mrf.mxu0
        %v446 = vadd.f32 %v387, %v445
        %447 = vmatmul.f32.gmra.mxu0 %v407
        %v448 = vpop.f32.mrf.mxu0
        %v449 = vadd.f32 %v392, %v448
        %450 = vmatmul.f32.gmra.mxu0 %v410
        %v451 = vpop.f32.mrf.mxu0
        %v452 = vadd.f32 %v397, %v451
        %453 = vdwg.mxu0
        %454 = vmatpush.msra.mxu0 0.0
        %455 = vmatpush.msra.mxu0 0.0
        %456 = vmatpush.msra.mxu0 0.0
        %457 = vmatpush.msra.mxu0 0.0
        %458 = vmatpush.msra.mxu0 0.0
        %459 = vmatpush.msra.mxu0 0.0
        %460 = vmatpush.msra.mxu0 0.0
        %461 = vmatpush.msra.mxu0 0.0
        %462 = vmatpush.msra.mxu0 0.0
        %463 = vmatpush.msra.mxu0 0.0
        %464 = vmatpush.msra.mxu0 0.0
        %465 = vmatpush.msra.mxu0 %v417
        %466 = vmatpush.msra.mxu0 %v364
        %467 = vmatpush.msra.mxu0 %v360
        %468 = vmatpush.msra.mxu0 %v356
        %469 = vmatpush.msra.mxu0 %v352
        %470 = vmatmul.f32.gmra.mxu0 %v401
        %v471 = vpop.f32.mrf.mxu0
        %v472 = vadd.f32 %v382, %v471
        %473 = vmatmul.f32.gmra.mxu0 %v404
        %v474 = vpop.f32.mrf.mxu0
        %v475 = vadd.f32 %v387, %v474
        %476 = vmatmul.f32.gmra.mxu0 %v407
        %v477 = vpop.f32.mrf.mxu0
        %v478 = vadd.f32 %v392, %v477
        %479 = vmatmul.f32.gmra.mxu0 %v410
        %v480 = vpop.f32.mrf.mxu0
        %v481 = vadd.f32 %v397, %v480
        %482 = vdwg.mxu0
        %483 = vmatpush.msra.mxu0 0.0
        %484 = vmatpush.msra.mxu0 0.0
        %485 = vmatpush.msra.mxu0 0.0
        %486 = vmatpush.msra.mxu0 0.0
        %487 = vmatpush.msra.mxu0 0.0
        %488 = vmatpush.msra.mxu0 0.0
        %489 = vmatpush.msra.mxu0 0.0
        %490 = vmatpush.msra.mxu0 0.0
        %491 = vmatpush.msra.mxu0 0.0
        %492 = vmatpush.msra.mxu0 0.0
        %493 = vmatpush.msra.mxu0 0.0
        %494 = vmatpush.msra.mxu0 %v420
        %495 = vmatpush.msra.mxu0 %v365
        %496 = vmatpush.msra.mxu0 %v361
        %497 = vmatpush.msra.mxu0 %v357
        %498 = vmatpush.msra.mxu0 %v353
        %499 = vmatmul.f32.gmra.mxu0 %v401
        %v500 = vpop.f32.mrf.mxu0
        %v501 = vadd.f32 %v382, %v500
        %502 = vmatmul.f32.gmra.mxu0 %v404
        %v503 = vpop.f32.mrf.mxu0
        %v504 = vadd.f32 %v387, %v503
        %505 = vmatmul.f32.gmra.mxu0 %v407
        %v506 = vpop.f32.mrf.mxu0
        %v507 = vadd.f32 %v392, %v506
        %508 = vmatmul.f32.gmra.mxu0 %v410
        %v509 = vpop.f32.mrf.mxu0
        %v510 = vadd.f32 %v397, %v509
        %511 = vdwg.mxu0
        %512 = vmatpush.msra.mxu0 0.0
        %513 = vmatpush.msra.mxu0 0.0
        %514 = vmatpush.msra.mxu0 0.0
        %515 = vmatpush.msra.mxu0 0.0
        %516 = vmatpush.msra.mxu0 0.0
        %517 = vmatpush.msra.mxu0 0.0
        %518 = vmatpush.msra.mxu0 0.0
        %519 = vmatpush.msra.mxu0 0.0
        %520 = vmatpush.msra.mxu0 0.0
        %521 = vmatpush.msra.mxu0 0.0
        %522 = vmatpush.msra.mxu0 0.0
        %523 = vmatpush.msra.mxu0 %v423
        %524 = vmatpush.msra.mxu0 %v366
        %525 = vmatpush.msra.mxu0 %v362
        %526 = vmatpush.msra.mxu0 %v358
        %527 = vmatpush.msra.mxu0 %v354
        %528 = vmatmul.f32.gmra.mxu0 %v401
        %v529 = vpop.f32.mrf.mxu0
        %v530 = vadd.f32 %v382, %v529
        %531 = vmatmul.f32.gmra.mxu0 %v404
        %v532 = vpop.f32.mrf.mxu0
        %v533 = vadd.f32 %v387, %v532
        %534 = vmatmul.f32.gmra.mxu0 %v407
        %v535 = vpop.f32.mrf.mxu0
        %v536 = vadd.f32 %v392, %v535
        %537 = vmatmul.f32.gmra.mxu0 %v410
        %v538 = vpop.f32.mrf.mxu0
        %v539 = vadd.f32 %v397, %v538
        %540 = vdwg.mxu0
        %v541 = vmax.f32 %v443, 0.0
        %v542 = vmax.f32 %v472, 0.0
        %v543 = vmax.f32 %v501, 0.0
        %v544 = vmax.f32 %v530, 0.0
        %v545 = vmax.f32 %v446, 0.0
        %v546 = vmax.f32 %v475, 0.0
        %v547 = vmax.f32 %v504, 0.0
        %v548 = vmax.f32 %v533, 0.0
        %v549 = vmax.f32 %v449, 0.0
        %v550 = vmax.f32 %v478, 0.0
        %v551 = vmax.f32 %v507, 0.0
        %v552 = vmax.f32 %v536, 0.0
        %v553 = vmax.f32 %v452, 0.0
        %v554 = vmax.f32 %v481, 0.0
        %v555 = vmax.f32 %v510, 0.0
        %v556 = vmax.f32 %v539, 0.0
        %v557 = vld [vmem:[%s4] sm:$0xff]
        %v558 = vld [vmem:[%s4 + $0x8] sm:$0xff]
        %v559 = vld [vmem:[%s5] sm:$0xff]
        %v560 = vld [vmem:[%s5 + $0x8] sm:$0xff]
        %562 = vset.pattern.permute.xlu0 0
        %563 = vperm.xlu0 %562, %v559
        %v564 = vpop.permute.xlu0 %563
        %567 = vset.pattern.permute.xlu0 0
        %568 = vperm.xlu0 %567, %v560
        %v569 = vpop.permute.xlu0 %568
        %vm571 = vcmask 261120
        %v573 = vsel %vm571, %v557, 0
        %v576 = vsel %vm571, %v558, 0
        %578 = vmatpush.msra.mxu0 0.0
        %579 = vmatpush.msra.mxu0 0.0
        %580 = vmatpush.msra.mxu0 0.0
        %581 = vmatpush.msra.mxu0 0.0
        %582 = vmatpush.msra.mxu0 0.0
        %583 = vmatpush.msra.mxu0 0.0
        %584 = vmatpush.msra.mxu0 0.0
        %585 = vmatpush.msra.mxu0 0.0
        %586 = vmatpush.msra.mxu0 0.0
        %587 = vmatpush.msra.mxu0 0.0
        %588 = vmatpush.msra.mxu0 0.0
        %589 = vmatpush.msra.mxu0 0.0
        %590 = vmatpush.msra.mxu0 %v553
        %591 = vmatpush.msra.mxu0 %v549
        %592 = vmatpush.msra.mxu0 %v545
        %593 = vmatpush.msra.mxu0 %v541
        %594 = vmatmul.f32.gmra.mxu0 %v573
        %v595 = vpop.f32.mrf.mxu0
        %v596 = vadd.f32 %v564, %v595
        %597 = vmatmul.f32.gmra.mxu0 %v576
        %v598 = vpop.f32.mrf.mxu0
        %v599 = vadd.f32 %v569, %v598
        %600 = vdwg.mxu0
        %601 = vmatpush.msra.mxu0 0.0
        %602 = vmatpush.msra.mxu0 0.0
        %603 = vmatpush.msra.mxu0 0.0
        %604 = vmatpush.msra.mxu0 0.0
        %605 = vmatpush.msra.mxu0 0.0
        %606 = vmatpush.msra.mxu0 0.0
        %607 = vmatpush.msra.mxu0 0.0
        %608 = vmatpush.msra.mxu0 0.0
        %609 = vmatpush.msra.mxu0 0.0
        %610 = vmatpush.msra.mxu0 0.0
        %611 = vmatpush.msra.mxu0 0.0
        %612 = vmatpush.msra.mxu0 0.0
        %613 = vmatpush.msra.mxu0 %v554
        %614 = vmatpush.msra.mxu0 %v550
        %615 = vmatpush.msra.mxu0 %v546
        %616 = vmatpush.msra.mxu0 %v542
        %617 = vmatmul.f32.gmra.mxu0 %v573
        %v618 = vpop.f32.mrf.mxu0
        %v619 = vadd.f32 %v564, %v618
        %620 = vmatmul.f32.gmra.mxu0 %v576
        %v621 = vpop.f32.mrf.mxu0
        %v622 = vadd.f32 %v569, %v621
        %623 = vdwg.mxu0
        %624 = vmatpush.msra.mxu0 0.0
        %625 = vmatpush.msra.mxu0 0.0
        %626 = vmatpush.msra.mxu0 0.0
        %627 = vmatpush.msra.mxu0 0.0
        %628 = vmatpush.msra.mxu0 0.0
        %629 = vmatpush.msra.mxu0 0.0
        %630 = vmatpush.msra.mxu0 0.0
        %631 = vmatpush.msra.mxu0 0.0
        %632 = vmatpush.msra.mxu0 0.0
        %633 = vmatpush.msra.mxu0 0.0
        %634 = vmatpush.msra.mxu0 0.0
        %635 = vmatpush.msra.mxu0 0.0
        %636 = vmatpush.msra.mxu0 %v555
        %637 = vmatpush.msra.mxu0 %v551
        %638 = vmatpush.msra.mxu0 %v547
        %639 = vmatpush.msra.mxu0 %v543
        %640 = vmatmul.f32.gmra.mxu0 %v573
        %v641 = vpop.f32.mrf.mxu0
        %v642 = vadd.f32 %v564, %v641
        %643 = vmatmul.f32.gmra.mxu0 %v576
        %v644 = vpop.f32.mrf.mxu0
        %v645 = vadd.f32 %v569, %v644
        %646 = vdwg.mxu0
        %647 = vmatpush.msra.mxu0 0.0
        %648 = vmatpush.msra.mxu0 0.0
        %649 = vmatpush.msra.mxu0 0.0
        %650 = vmatpush.msra.mxu0 0.0
        %651 = vmatpush.msra.mxu0 0.0
        %652 = vmatpush.msra.mxu0 0.0
        %653 = vmatpush.msra.mxu0 0.0
        %654 = vmatpush.msra.mxu0 0.0
        %655 = vmatpush.msra.mxu0 0.0
        %656 = vmatpush.msra.mxu0 0.0
        %657 = vmatpush.msra.mxu0 0.0
        %658 = vmatpush.msra.mxu0 0.0
        %659 = vmatpush.msra.mxu0 %v556
        %660 = vmatpush.msra.mxu0 %v552
        %661 = vmatpush.msra.mxu0 %v548
        %662 = vmatpush.msra.mxu0 %v544
        %663 = vmatmul.f32.gmra.mxu0 %v573
        %v664 = vpop.f32.mrf.mxu0
        %v665 = vadd.f32 %v564, %v664
        %666 = vmatmul.f32.gmra.mxu0 %v576
        %v667 = vpop.f32.mrf.mxu0
        %v668 = vadd.f32 %v569, %v667
        %669 = vdwg.mxu0
        %v670 = vld [vmem:[%s308] sm:$0xff]
        %v671 = vld [vmem:[%s308 + $0x8] sm:$0xff]
        %v672 = vld [vmem:[%s308 + $0x10] sm:$0xff]
        %v673 = vld [vmem:[%s308 + $0x18] sm:$0xff]
        %v674 = vld [vmem:[%s308 + $0x20] sm:$0xff]
        %v675 = vld [vmem:[%s308 + $0x28] sm:$0xff]
        %v676 = vld [vmem:[%s308 + $0x30] sm:$0xff]
        %v677 = vld [vmem:[%s308 + $0x38] sm:$0xff]
        %v678 = vadd.f32 %v596, %v670
        %v679 = vadd.f32 %v619, %v671
        %v680 = vadd.f32 %v642, %v672
        %v681 = vadd.f32 %v665, %v673
        %v682 = vadd.f32 %v599, %v674
        %v683 = vadd.f32 %v622, %v675
        %v684 = vadd.f32 %v645, %v676
        %v685 = vadd.f32 %v668, %v677
        %686 = vst [vmem:[%s337] sm:$0xff] %v678
        %687 = vst [vmem:[%s337 + $0x8] sm:$0xff] %v679
        %688 = vst [vmem:[%s337 + $0x10] sm:$0xff] %v680
        %689 = vst [vmem:[%s337 + $0x18] sm:$0xff] %v681
        %690 = vst [vmem:[%s337 + $0x20] sm:$0xff] %v682
        %691 = vst [vmem:[%s337 + $0x28] sm:$0xff] %v683
        %692 = vst [vmem:[%s337 + $0x30] sm:$0xff] %v684
        %693 = vst [vmem:[%s337 + $0x38] sm:$0xff] %v685
        %s694 = sand.u32 %s161, 1
        %s695 = sand.u32 %s161, 1
        %s696 = smul.addr %s695, 64
        %s697 = scalar_lea.vmem [#allocation4], %s696
        // Predicated region
        $region91: #{res_edge_forward.1} parent=81 // pred_check
          %p698 = pneg %p171
        $region92: #{res_edge_forward.1} parent=81 // pred_check_branch
          %700 = sbr.rel (%p698) target = $region94
        $region93: #{res_edge_forward.1} parent=81 // pred_region
          %s701 = smul.u32 4, %s17
          %s702 = smul.addr %s701, 8
          %s703 = scalar_lea.vmem %s6, %s702
          // Predicated region
          $region95: #{res_edge_forward.1} parent=93 // pred_check
            _
          $region96: #{res_edge_forward.1} parent=93 // pred_check_branch
            %705 = sbr.rel (0) target = $region98
          $region97: #{res_edge_forward.1} parent=93 // pred_region
            // Predicated region
            $region99: #{res_edge_forward.1} parent=97 // pred_check
              _
            $region100: #{res_edge_forward.1} parent=97 // pred_check_branch
              %707 = sbr.rel (0) target = $region102
            $region101: #{res_edge_forward.1} parent=97 // pred_region
              loop: start=0, step=1, limit=1
              $region103: #{res_edge_forward.1} parent=101 // loop_pre_header
                _
              $region104: #{res_edge_forward.1} parent=101 // loop_header
                %s709 = sphi 0, %s713
                %p710 = scmp.ge.s32.totalorder %s709, 1
                %s714 = sphi %s697, %s697
                %s715 = sphi %s703, %s703
              $region105: #{res_edge_forward.1} parent=101 // loop_header_branch
                %712 = sbr.rel (%p710) target = $region109
              $region106: #{res_edge_forward.1} parent=101 // loop_body
                %v716 = vld [vmem:[%s714] sm:$0xff]
                %717 = vst [vmem:[%s715] sm:$0xff] %v716
                %v718 = vld [vmem:[%s714 + $0x8] sm:$0xff]
                %719 = vst [vmem:[%s715 + $0x8] sm:$0xff] %v718
                %v720 = vld [vmem:[%s714 + $0x10] sm:$0xff]
                %721 = vst [vmem:[%s715 + $0x10] sm:$0xff] %v720
                %v722 = vld [vmem:[%s714 + $0x18] sm:$0xff]
                %723 = vst [vmem:[%s715 + $0x18] sm:$0xff] %v722
                %v724 = vld [vmem:[%s714 + $0x20] sm:$0xff]
                %725 = vst [vmem:[%s715 + $0x40] sm:$0xff] %v724
                %v726 = vld [vmem:[%s714 + $0x28] sm:$0xff]
                %727 = vst [vmem:[%s715 + $0x48] sm:$0xff] %v726
                %v728 = vld [vmem:[%s714 + $0x30] sm:$0xff]
                %729 = vst [vmem:[%s715 + $0x50] sm:$0xff] %v728
                %v730 = vld [vmem:[%s714 + $0x38] sm:$0xff]
                %731 = vst [vmem:[%s715 + $0x58] sm:$0xff] %v730
              $region107: #{res_edge_forward.1} parent=101 // loop_footer
                %s713 = sadd.s32 1, %s709
              $region108: #{res_edge_forward.1} parent=101 // loop_footer_branch
                %708 = sbr.rel target = $region104
              $region109: #{res_edge_forward.1} parent=101 // loop_exit
                _
            $region102: #{res_edge_forward.1} parent=97 // pred_fallthru
              _
            // Predicated region
            $region110: #{res_edge_forward.1} parent=97 // pred_check
              _
            $region111: #{res_edge_forward.1} parent=97 // pred_check_branch
              %733 = sbr.rel target = $region113
            $region112: #{res_edge_forward.1} parent=97 // pred_region
              _
            $region113: #{res_edge_forward.1} parent=97 // pred_fallthru
              _
          $region98: #{res_edge_forward.1} parent=93 // pred_fallthru
            _
          %734 = vnop
        $region94: #{res_edge_forward.1} parent=81 // pred_fallthru
          _
      $region82: #{res_edge_forward.1} parent=5 // pred_fallthru
        _
      %p735 = scmp.le.s32.totalorder 2, %s12
      // Predicated region
      $region114: #{res_edge_forward.1} parent=5 // pred_check
        %p736 = pneg %p735
      $region115: #{res_edge_forward.1} parent=5 // pred_check_branch
        %738 = sbr.rel (%p736) target = $region117
      $region116: #{res_edge_forward.1} parent=5 // pred_region
        %s739 = ssub.s32 %s12, 2
        // Predicated region
        $region118: #{res_edge_forward.1} parent=116 // pred_check
          %p740 = pneg %p177
        $region119: #{res_edge_forward.1} parent=116 // pred_check_branch
          %742 = sbr.rel (%p740) target = $region121
        $region120: #{res_edge_forward.1} parent=116 // pred_region
          %s743 = sand.u32 %s162, 1
          %s744 = sand.u32 %s162, 1
          %s745 = smul.addr %s744, 64
          %s746 = scalar_lea.vmem [#allocation4], %s745
        $region121: #{res_edge_forward.1} parent=116 // pred_fallthru
          _
      $region117: #{res_edge_forward.1} parent=5 // pred_fallthru
        _
    $region6: #{res_edge_forward.1} parent=1 // loop_footer
      %s16 = sadd.s32 1, %s12
    $region7: #{res_edge_forward.1} parent=1 // loop_footer_branch
      %11 = sbr.rel target = $region3
    $region8: #{res_edge_forward.1} parent=1 // loop_exit
      _

</llo_original>
